<compile_context>
chip_gen: v7x
topology: tpu7x:2x2x1
jax: 0.10.0
libtpu: 0.0.40
codegen_flags: <defaults>
</compile_context>

<pallas_src>
import jax
import jax.numpy as jnp
from jax.experimental import pallas as pl
from jax.experimental.pallas import tpu as pltpu


def attention_once_kernel(x_ref, y_ref, wq_ref, wkv_ref, bv_ref, wt_ref, bt_ref, o_ref):
    x = x_ref[0]            # (C, N)  f32 (kept f32 for exact residual / softmax math)
    y = y_ref[0]            # (C, N)  compute dtype
    wq = wq_ref[...]        # (C, C)  compute dtype (shared q/k weight, no bias)
    wkv = wkv_ref[...]      # (2C, C) compute dtype ([Wqk; Wv] stacked)
    bv = bv_ref[...]        # (C, 1)  f32
    wt = wt_ref[...]        # (C, C)  compute dtype
    bt = bt_ref[...]        # (C, 1)  f32

    cdt = wq.dtype
    C = x.shape[0]
    x_c = x.astype(cdt)

    # --- projections: 2 MXU calls instead of 3, f32 accumulation -------------
    qy = jnp.dot(wq, y, preferred_element_type=jnp.float32)       # (C, N)  = q_conv(y)
    kv = jnp.dot(wkv, x_c, preferred_element_type=jnp.float32)    # (2C, N) = [k_conv(x); v_conv(x)]
    x_k = kv[:C]                                                  # (C, N)
    x_v = kv[C:] + bv                                             # (C, N)

    # --- energy^T[m, n] = sum_c k(x)[c, m] * q(y)[c, n] -----------------------
    # Transposed (keys x queries) so every per-query statistic is a lane-dense
    # (1, N) row vector; contraction over C needs no XLU transpose.
    energy_t = jax.lax.dot_general(
        x_k.astype(cdt), qy.astype(cdt),
        dimension_numbers=(((0,), (0,)), ((), ())),
        preferred_element_type=jnp.float32)                       # (Nk, Nq)

    # --- softmax over keys == axis 0 of energy_t, f32 -------------------------
    e_max = jnp.max(energy_t, axis=0, keepdims=True)              # (1, Nq)
    p_t = jnp.exp(energy_t - e_max)                               # (Nk, Nq) unnormalized
    row_sum = jnp.sum(p_t, axis=0, keepdims=True)                 # (1, Nq) softmax denom (f32)
    inv_row = pl.reciprocal(row_sum, approx=False)                # (1, Nq)

    p_c = p_t.astype(cdt)                                         # single cast reused by both dots

    # --- column renormalization: attention / (1e-7 + attention.sum(axis=0)) ---
    # col_sum[m] = sum_n p[n, m] * inv_row[n]   -> (1, Nk) MXU matvec
    col_sum = jax.lax.dot_general(
        inv_row.astype(cdt), p_c,
        dimension_numbers=(((1,), (1,)), ((), ())),
        preferred_element_type=jnp.float32)                       # (1, Nk)
    inv_col = pl.reciprocal(1e-07 + col_sum, approx=False)        # (1, Nk)

    # --- x_r = x_v @ attn_final = ((x_v * inv_row) @ p^T) * inv_col -----------
    # both N^2 rescales folded into (C, N)-sized multiplies
    xv_s = (x_v * inv_row).astype(cdt)                            # (C, Nq)
    x_r = jax.lax.dot_general(
        xv_s, p_c,
        dimension_numbers=(((1,), (1,)), ((), ())),
        preferred_element_type=jnp.float32) * inv_col             # (C, Nk)

    # --- trans_conv(x - x_r), ReLU, residual ----------------------------------
    t = jnp.dot(wt, (x - x_r).astype(cdt), preferred_element_type=jnp.float32) + bt
    o_ref[0] = (x + jnp.maximum(t, 0.0)).astype(o_ref.dtype)


def attention_once(x, y, wqk, wv, bv, wt, bt, *, compute_dtype=jnp.bfloat16):
    """Attention_once forward.  x, y: (B, C, N); weights (C, C); biases (C, 1)."""
    B, C, N = x.shape
    cdt = jnp.dtype(compute_dtype)

    x = x.astype(jnp.float32)
    y_c = y.astype(cdt)                                        # only feeds the q projection
    w_q = wqk.astype(cdt)
    w_kv = jnp.concatenate([wqk, wv], axis=0).astype(cdt)      # (2C, C) stacked k/v weight
    w_t = wt.astype(cdt)
    bv = bv.astype(jnp.float32)
    bt = bt.astype(jnp.float32)

    # Scoped-VMEM budget: ~2 f32 NxN temps (energy^T, exp) + 1 compute-dtype
    # NxN copy + (C, N) I/O and temps + weights, with 2x headroom; clamped.
    cb = cdt.itemsize
    est = (N * N * (3 * 4 + cb)
           + 2 * C * N * (2 * 4 + cb)        # double-buffered x/out (f32) + y (cdt)
           + 8 * C * N * 4                   # in-kernel (C, N)-sized temps
           + 2 * (4 * C * C * cb + 2 * C * 4))
    vmem_limit = int(min(max(2 * est, 32 * 1024 * 1024), 100 * 1024 * 1024))

    return pl.pallas_call(
        attention_once_kernel,
        out_shape=jax.ShapeDtypeStruct((B, C, N), jnp.float32),
        grid_spec=pltpu.PrefetchScalarGridSpec(
            num_scalar_prefetch=0,
            grid=(B,),
            in_specs=[
                pl.BlockSpec((1, C, N), lambda b: (b, 0, 0)),   # x  (f32)
                pl.BlockSpec((1, C, N), lambda b: (b, 0, 0)),   # y  (compute dtype)
                pl.BlockSpec((C, C), lambda b: (0, 0)),         # Wqk (shared q/k)
                pl.BlockSpec((2 * C, C), lambda b: (0, 0)),     # [Wqk; Wv]
                pl.BlockSpec((C, 1), lambda b: (0, 0)),         # bv
                pl.BlockSpec((C, C), lambda b: (0, 0)),         # Wt
                pl.BlockSpec((C, 1), lambda b: (0, 0)),         # bt
            ],
            out_specs=pl.BlockSpec((1, C, N), lambda b: (b, 0, 0)),
        ),
        compiler_params=pltpu.CompilerParams(
            dimension_semantics=("parallel",),
            vmem_limit_bytes=vmem_limit),
    )(x, y_c, w_q, w_kv, bv, w_t, bt)


def attention_once_ref(x, y, wqk, wv, bv, wt, bt):
    """Pure-JAX f32 reference mirroring the PyTorch forward."""
    x_q = jnp.einsum('oc,bcn->bon', wqk, y).transpose(0, 2, 1)        # (B, N, C)
    x_k = jnp.einsum('oc,bcn->bon', wqk, x)                           # (B, C, N)
    x_v = jnp.einsum('oc,bcn->bon', wv, x) + bv[None]                 # (B, C, N)
    energy = jnp.einsum('bnc,bcm->bnm', x_q, x_k)                     # (B, N, N)
    attn = jax.nn.softmax(energy, axis=-1)
    attn = attn / (1e-07 + attn.sum(axis=1, keepdims=True))
    x_r = jnp.einsum('bcn,bnm->bcm', x_v, attn)
    t = jnp.einsum('oc,bcn->bon', wt, x - x_r) + bt[None]
    return x + jnp.maximum(t, 0.0)


if __name__ == "__main__":
    B, C, N = 2, 8, 16

    key = jax.random.PRNGKey(0)
    kx, ky, k1, k2, k3, k4, k5 = jax.random.split(key, 7)

    x = jax.random.normal(kx, (B, C, N), dtype=jnp.float32)
    y = jax.random.normal(ky, (B, C, N), dtype=jnp.float32)

    # Conv1d(kernel_size=1) weights are (C_out, C_in) matrices; biases (C, 1).
    scale = 1.0 / (C ** 0.5)
    wqk = jax.random.normal(k1, (C, C), dtype=jnp.float32) * scale   # shared q/k weight, no bias
    wv = jax.random.normal(k2, (C, C), dtype=jnp.float32) * scale
    bv = jax.random.normal(k3, (C, 1), dtype=jnp.float32) * scale
    wt = jax.random.normal(k4, (C, C), dtype=jnp.float32) * scale
    bt = jax.random.normal(k5, (C, 1), dtype=jnp.float32) * scale

    ref = attention_once_ref(x, y, wqk, wv, bv, wt, bt)

    # Exact mode (f32 MXU operands): must match the reference tightly.
    out_f32 = jax.block_until_ready(
        attention_once(x, y, wqk, wv, bv, wt, bt, compute_dtype=jnp.float32))
    assert out_f32.shape == (B, C, N)
    assert jnp.allclose(out_f32, ref, atol=1e-4, rtol=1e-4), "f32 kernel mismatch vs JAX reference"

    # Fast mode (bf16 MXU operands, f32 accumulation / f32 softmax math).
    out_bf16 = jax.block_until_ready(
        attention_once(x, y, wqk, wv, bv, wt, bt, compute_dtype=jnp.bfloat16))
    assert out_bf16.shape == (B, C, N)
    assert jnp.allclose(out_bf16, ref, atol=1e-1, rtol=1e-1), "bf16 kernel drifted from reference"

    print("KERNEL_OK")
</pallas_src>

<mosaic_0001>
module attributes {stable_mosaic.version = 11 : i64} {
  func.func @attention_once_kernel(%arg0: i32, %arg1: memref<1x8x16xf32, #tpu.memory_space<vmem>>, %arg2: memref<1x8x16xf32, #tpu.memory_space<vmem>>, %arg3: memref<8x8xf32, #tpu.memory_space<vmem>>, %arg4: memref<16x8xf32, #tpu.memory_space<vmem>>, %arg5: memref<8x1xf32, #tpu.memory_space<vmem>>, %arg6: memref<8x8xf32, #tpu.memory_space<vmem>>, %arg7: memref<8x1xf32, #tpu.memory_space<vmem>>, %arg8: memref<1x8x16xf32, #tpu.memory_space<vmem>>) attributes {dimension_semantics = [#tpu.dimension_semantics<parallel>], iteration_bounds = array<i64: 2>, scalar_prefetch = 0 : i64, scratch_operands = 0 : i64, tpu.core_type = #tpu.core_type<tc>, window_params = [{transform_indices = @transform_0, window_bounds = array<i64: 1, 8, 16>}, {transform_indices = @transform_1, window_bounds = array<i64: 1, 8, 16>}, {pipeline_mode = #tpu.pipeline_mode<synchronous>, transform_indices = @transform_2, window_bounds = array<i64: 8, 8>}, {pipeline_mode = #tpu.pipeline_mode<synchronous>, transform_indices = @transform_3, window_bounds = array<i64: 16, 8>}, {pipeline_mode = #tpu.pipeline_mode<synchronous>, transform_indices = @transform_4, window_bounds = array<i64: 8, 1>}, {pipeline_mode = #tpu.pipeline_mode<synchronous>, transform_indices = @transform_5, window_bounds = array<i64: 8, 8>}, {pipeline_mode = #tpu.pipeline_mode<synchronous>, transform_indices = @transform_6, window_bounds = array<i64: 8, 1>}, {transform_indices = @transform_7, window_bounds = array<i64: 1, 8, 16>}]} {
    %c0 = arith.constant 0 : index
    %c0_0 = arith.constant 0 : index
    %c0_1 = arith.constant 0 : index
    %0 = vector.load %arg1[%c0, %c0_0, %c0_1] : memref<1x8x16xf32, #tpu.memory_space<vmem>>, vector<1x8x16xf32>
    %1 = vector.shape_cast %0 : vector<1x8x16xf32> to vector<8x16xf32>
    %c0_2 = arith.constant 0 : index
    %c0_3 = arith.constant 0 : index
    %c0_4 = arith.constant 0 : index
    %2 = vector.load %arg2[%c0_2, %c0_3, %c0_4] : memref<1x8x16xf32, #tpu.memory_space<vmem>>, vector<1x8x16xf32>
    %3 = vector.shape_cast %2 : vector<1x8x16xf32> to vector<8x16xf32>
    %c0_5 = arith.constant 0 : index
    %c0_6 = arith.constant 0 : index
    %4 = vector.load %arg3[%c0_5, %c0_6] : memref<8x8xf32, #tpu.memory_space<vmem>>, vector<8x8xf32>
    %c0_7 = arith.constant 0 : index
    %c0_8 = arith.constant 0 : index
    %5 = vector.load %arg4[%c0_7, %c0_8] : memref<16x8xf32, #tpu.memory_space<vmem>>, vector<16x8xf32>
    %c0_9 = arith.constant 0 : index
    %c0_10 = arith.constant 0 : index
    %6 = vector.load %arg5[%c0_9, %c0_10] : memref<8x1xf32, #tpu.memory_space<vmem>>, vector<8x1xf32>
    %c0_11 = arith.constant 0 : index
    %c0_12 = arith.constant 0 : index
    %7 = vector.load %arg6[%c0_11, %c0_12] : memref<8x8xf32, #tpu.memory_space<vmem>>, vector<8x8xf32>
    %c0_13 = arith.constant 0 : index
    %c0_14 = arith.constant 0 : index
    %8 = vector.load %arg7[%c0_13, %c0_14] : memref<8x1xf32, #tpu.memory_space<vmem>>, vector<8x1xf32>
    %cst = arith.constant dense<0.000000e+00> : vector<8x16xf32>
    %9 = tpu.matmul %4, %3, %cst {dimension_numbers = #tpu.dot_dimension_numbers<[1], [0], [0], [1], [0, 0, 1, 1], [], []>} : vector<8x8xf32>, vector<8x16xf32>, vector<8x16xf32> -> vector<8x16xf32>
    %cst_15 = arith.constant dense<0.000000e+00> : vector<16x16xf32>
    %10 = tpu.matmul %5, %1, %cst_15 {dimension_numbers = #tpu.dot_dimension_numbers<[1], [0], [0], [1], [0, 0, 1, 1], [], []>} : vector<16x8xf32>, vector<8x16xf32>, vector<16x16xf32> -> vector<16x16xf32>
    %11 = vector.extract_strided_slice %10 {offsets = [0, 0], sizes = [8, 16], strides = [1, 1]} : vector<16x16xf32> to vector<8x16xf32>
    %12 = vector.extract_strided_slice %10 {offsets = [8, 0], sizes = [8, 16], strides = [1, 1]} : vector<16x16xf32> to vector<8x16xf32>
    %13 = vector.broadcast %6 : vector<8x1xf32> to vector<8x16xf32>
    %14 = arith.addf %12, %13 : vector<8x16xf32>
    %cst_16 = arith.constant dense<0.000000e+00> : vector<16x16xf32>
    %15 = tpu.matmul %11, %9, %cst_16 {dimension_numbers = #tpu.dot_dimension_numbers<[0], [0], [1], [1], [0, 1, 1, 1], [], []>} : vector<8x16xf32>, vector<8x16xf32>, vector<16x16xf32> -> vector<16x16xf32>
    %cst_17 = arith.constant dense<0xFF800000> : vector<16xf32>
    %16 = vector.multi_reduction <maximumf>, %15, %cst_17 [0] : vector<16x16xf32> to vector<16xf32>
    %17 = vector.shape_cast %16 : vector<16xf32> to vector<1x16xf32>
    %18 = vector.broadcast %17 : vector<1x16xf32> to vector<16x16xf32>
    %19 = arith.subf %15, %18 : vector<16x16xf32>
    %20 = math.exp %19 : vector<16x16xf32>
    %cst_18 = arith.constant dense<0.000000e+00> : vector<16xf32>
    %21 = vector.multi_reduction <add>, %20, %cst_18 [0] : vector<16x16xf32> to vector<16xf32>
    %22 = vector.shape_cast %21 : vector<16xf32> to vector<1x16xf32>
    %23 = tpu.reciprocal %22 : vector<1x16xf32> -> vector<1x16xf32>
    %cst_19 = arith.constant dense<0.000000e+00> : vector<1x16xf32>
    %24 = tpu.matmul %23, %20, %cst_19 {dimension_numbers = #tpu.dot_dimension_numbers<[1], [1], [0], [0], [0, 0, 1, 0], [], []>} : vector<1x16xf32>, vector<16x16xf32>, vector<1x16xf32> -> vector<1x16xf32>
    %cst_20 = arith.constant 1.000000e-07 : f32
    %25 = vector.broadcast %cst_20 : f32 to vector<1x16xf32>
    %26 = arith.addf %25, %24 : vector<1x16xf32>
    %27 = tpu.reciprocal %26 : vector<1x16xf32> -> vector<1x16xf32>
    %28 = vector.broadcast %23 : vector<1x16xf32> to vector<8x16xf32>
    %29 = arith.mulf %14, %28 : vector<8x16xf32>
    %cst_21 = arith.constant dense<0.000000e+00> : vector<8x16xf32>
    %30 = tpu.matmul %29, %20, %cst_21 {dimension_numbers = #tpu.dot_dimension_numbers<[1], [1], [0], [0], [0, 0, 1, 0], [], []>} : vector<8x16xf32>, vector<16x16xf32>, vector<8x16xf32> -> vector<8x16xf32>
    %31 = vector.broadcast %27 : vector<1x16xf32> to vector<8x16xf32>
    %32 = arith.mulf %30, %31 : vector<8x16xf32>
    %33 = arith.subf %1, %32 : vector<8x16xf32>
    %cst_22 = arith.constant dense<0.000000e+00> : vector<8x16xf32>
    %34 = tpu.matmul %7, %33, %cst_22 {dimension_numbers = #tpu.dot_dimension_numbers<[1], [0], [0], [1], [0, 0, 1, 1], [], []>} : vector<8x8xf32>, vector<8x16xf32>, vector<8x16xf32> -> vector<8x16xf32>
    %35 = vector.broadcast %8 : vector<8x1xf32> to vector<8x16xf32>
    %36 = arith.addf %34, %35 : vector<8x16xf32>
    %cst_23 = arith.constant 0.000000e+00 : f32
    %37 = vector.broadcast %cst_23 : f32 to vector<8x16xf32>
    %38 = arith.maximumf %36, %37 : vector<8x16xf32>
    %39 = arith.addf %1, %38 : vector<8x16xf32>
    %c0_24 = arith.constant 0 : index
    %c0_25 = arith.constant 0 : index
    %c0_26 = arith.constant 0 : index
    %40 = vector.load %arg8[%c0_24, %c0_25, %c0_26] : memref<1x8x16xf32, #tpu.memory_space<vmem>>, vector<1x8x16xf32>
    %41 = vector.shape_cast %40 : vector<1x8x16xf32> to vector<8x16xf32>
    %42 = vector.shape_cast %39 : vector<8x16xf32> to vector<1x8x16xf32>
    tpu.vector_store %arg8[%c0_24, %c0_25, %c0_26], %42 {strides = array<i32>} : memref<1x8x16xf32, #tpu.memory_space<vmem>>, vector<1x8x16xf32>,
    return
  }
  func.func @transform_0(%arg0: i32) -> (i32, i32, i32) {
    %c0_i32 = arith.constant 0 : i32
    %c0_i32_0 = arith.constant 0 : i32
    %c0_i32_1 = arith.constant 0 : i32
    return %arg0, %c0_i32, %c0_i32_0 : i32, i32, i32
  }
  func.func @transform_1(%arg0: i32) -> (i32, i32, i32) {
    %c0_i32 = arith.constant 0 : i32
    %c0_i32_0 = arith.constant 0 : i32
    %c0_i32_1 = arith.constant 0 : i32
    return %arg0, %c0_i32, %c0_i32_0 : i32, i32, i32
  }
  func.func @transform_2(%arg0: i32) -> (i32, i32) {
    %c0_i32 = arith.constant 0 : i32
    %c0_i32_0 = arith.constant 0 : i32
    %c0_i32_1 = arith.constant 0 : i32
    return %c0_i32, %c0_i32_0 : i32, i32
  }
  func.func @transform_3(%arg0: i32) -> (i32, i32) {
    %c0_i32 = arith.constant 0 : i32
    %c0_i32_0 = arith.constant 0 : i32
    %c0_i32_1 = arith.constant 0 : i32
    return %c0_i32, %c0_i32_0 : i32, i32
  }
  func.func @transform_4(%arg0: i32) -> (i32, i32) {
    %c0_i32 = arith.constant 0 : i32
    %c0_i32_0 = arith.constant 0 : i32
    %c0_i32_1 = arith.constant 0 : i32
    return %c0_i32, %c0_i32_0 : i32, i32
  }
  func.func @transform_5(%arg0: i32) -> (i32, i32) {
    %c0_i32 = arith.constant 0 : i32
    %c0_i32_0 = arith.constant 0 : i32
    %c0_i32_1 = arith.constant 0 : i32
    return %c0_i32, %c0_i32_0 : i32, i32
  }
  func.func @transform_6(%arg0: i32) -> (i32, i32) {
    %c0_i32 = arith.constant 0 : i32
    %c0_i32_0 = arith.constant 0 : i32
    %c0_i32_1 = arith.constant 0 : i32
    return %c0_i32, %c0_i32_0 : i32, i32
  }
  func.func @transform_7(%arg0: i32) -> (i32, i32, i32) {
    %c0_i32 = arith.constant 0 : i32
    %c0_i32_0 = arith.constant 0 : i32
    %c0_i32_1 = arith.constant 0 : i32
    return %arg0, %c0_i32, %c0_i32_0 : i32, i32, i32
  }
}

</mosaic_0001>

<llo_original>
// kernel: tpu_custom_call.1
$region0: #{tpu_custom_call.1}
  #allocation0 [shape = 'u32[]', space=smem, size = 0x4, offset = 0x4, fixed_abs, tag = 'smem constant byte address 0x4 - core index']
  #allocation1 [shape = 'u32[144,128]{1,0:T(1,128)}', space=vmem, size = 0x12000, scoped, tag = 'internal scratch']
  %s0 = inlined_call_operand.vmem [shape: f32[2,8,16], index: 0, kind: input, shape index: {}]
  %s1 = inlined_call_operand.vmem [shape: f32[2,8,16], index: 1, kind: input, shape index: {}]
  %s2 = inlined_call_operand.vmem [shape: f32[8,8], index: 2, kind: input, shape index: {}]
  %s3 = inlined_call_operand.vmem [shape: f32[16,8], index: 3, kind: input, shape index: {}]
  %s4 = inlined_call_operand.vmem [shape: f32[8,1], index: 4, kind: input, shape index: {}]
  %s5 = inlined_call_operand.vmem [shape: f32[8,8], index: 5, kind: input, shape index: {}]
  %s6 = inlined_call_operand.vmem [shape: f32[8,1], index: 6, kind: input, shape index: {}]
  %s7 = inlined_call_operand.hbm [shape: f32[2,8,16], index: 7, kind: output, shape index: {}]
  %s8 = sld [smem:[#allocation0]]
  $region61: #{tpu_custom_call.1} parent=0
    _
  %s10 = ssub.s32 1, %s8
  %s11 = scalar_select 0, %s10, %s8
  $region1: #{tpu_custom_call.1} parent=0
    #allocation2 [shape = 'u8[8192]{0}', space=vmem, size = 0x2000, scoped, tag = 'output window, operand 0']
    #allocation3 [shape = 's32[2]{0}', space=sflag, size = 0x8, scoped, tag = 'scoped memory for tpu_custom_call.1']
    %12 = vsyncpa [#allocation3], 0
    %s13 = scalar_lea.sflag [#allocation3], 1
    %14 = vsyncpa %s13, 0
    loop: start=0, step=1, limit=4
    $region2: #{tpu_custom_call.1} parent=1 // loop_pre_header
      _
    $region3: #{tpu_custom_call.1} parent=1 // loop_header
      %s16 = sphi 0, %s20
      %p17 = scmp.ge.s32.totalorder %s16, 4
      %s26 = sphi 0, %s28
      %s29 = sphi 0, %s26
      %s30 = sphi 0, %s29
      %s46 = sphi 0, %s30
      %s52 = sphi 0, %s54
      %s55 = sphi 0, %s52
      %s56 = sphi 0, %s55
      %s72 = sphi 0, %s56
      %s76 = sphi 0, %s76
      %s78 = sphi 0, %s76
      %s79 = sphi 0, %s78
      %s93 = sphi 0, %s79
      %s97 = sphi 0, %s97
      %s99 = sphi 0, %s97
      %s100 = sphi 0, %s99
      %s114 = sphi 0, %s100
      %s118 = sphi 0, %s118
      %s120 = sphi 0, %s118
      %s121 = sphi 0, %s120
      %s135 = sphi 0, %s121
      %s139 = sphi 0, %s139
      %s141 = sphi 0, %s139
      %s142 = sphi 0, %s141
      %s156 = sphi 0, %s142
      %s160 = sphi 0, %s160
      %s162 = sphi 0, %s160
      %s163 = sphi 0, %s162
      %s177 = sphi 0, %s163
      %s183 = sphi 0, %s185
      %s186 = sphi 0, %s183
      %s187 = sphi 0, %s186
      %s203 = sphi 0, %s187
    $region4: #{tpu_custom_call.1} parent=1 // loop_header_branch
      %19 = sbr.rel (%p17) target = $region8
    $region5: #{tpu_custom_call.1} parent=1 // loop_body
      %s21 = ssub.s32 %s16, 1
      %s22 = ssub.s32 %s16, 2
      %s23 = sadd.s32 %s16, 1
      %s24 = ssub.s32 %s16, %s23
      %p25 = scmp.eq.s32.totalorder %s24, 0
      %s27 = sadd.s32 %s26, 1
      %s28 = scalar_select %p25, %s26, %s27
      %p31 = pneg %p25
      %p32 = scmp.eq.s32.totalorder %s16, 1
      %p33 = por %p31, %p32
      %p34 = scmp.ne.s32.totalorder %s26, %s29
      %p35 = scmp.eq.s32.totalorder %s16, 0
      %p36 = por %p34, %p35
      %p37 = scmp.ne.s32.totalorder %s26, %s29
      %p38 = scmp.eq.s32.totalorder %s21, 1
      %p39 = por %p37, %p38
      %p40 = scmp.ne.s32.totalorder %s29, %s30
      %p41 = scmp.eq.s32.totalorder %s21, 0
      %p42 = por %p40, %p41
      %p43 = scmp.ne.s32.totalorder %s29, %s30
      %p44 = scmp.eq.s32.totalorder %s22, 1
      %p45 = por %p43, %p44
      %p47 = scmp.ne.s32.totalorder %s30, %s46
      %p48 = scmp.eq.s32.totalorder %s22, 0
      %p49 = por %p47, %p48
      %s50 = ssub.s32 %s16, %s23
      %p51 = scmp.eq.s32.totalorder %s50, 0
      %s53 = sadd.s32 %s52, 1
      %s54 = scalar_select %p51, %s52, %s53
      %p57 = pneg %p51
      %p58 = scmp.eq.s32.totalorder %s16, 1
      %p59 = por %p57, %p58
      %p60 = scmp.ne.s32.totalorder %s52, %s55
      %p61 = scmp.eq.s32.totalorder %s16, 0
      %p62 = por %p60, %p61
      %p63 = scmp.ne.s32.totalorder %s52, %s55
      %p64 = scmp.eq.s32.totalorder %s21, 1
      %p65 = por %p63, %p64
      %p66 = scmp.ne.s32.totalorder %s55, %s56
      %p67 = scmp.eq.s32.totalorder %s21, 0
      %p68 = por %p66, %p67
      %p69 = scmp.ne.s32.totalorder %s55, %s56
      %p70 = scmp.eq.s32.totalorder %s22, 1
      %p71 = por %p69, %p70
      %p73 = scmp.ne.s32.totalorder %s56, %s72
      %p74 = scmp.eq.s32.totalorder %s22, 0
      %p75 = por %p73, %p74
      %s77 = sadd.s32 %s76, 1
      %p80 = scmp.eq.s32.totalorder %s16, 1
      %p81 = scmp.ne.s32.totalorder %s76, %s78
      %p82 = scmp.eq.s32.totalorder %s16, 0
      %p83 = por %p81, %p82
      %p84 = scmp.ne.s32.totalorder %s76, %s78
      %p85 = scmp.eq.s32.totalorder %s21, 1
      %p86 = por %p84, %p85
      %p87 = scmp.ne.s32.totalorder %s78, %s79
      %p88 = scmp.eq.s32.totalorder %s21, 0
      %p89 = por %p87, %p88
      %p90 = scmp.ne.s32.totalorder %s78, %s79
      %p91 = scmp.eq.s32.totalorder %s22, 1
      %p92 = por %p90, %p91
      %p94 = scmp.ne.s32.totalorder %s79, %s93
      %p95 = scmp.eq.s32.totalorder %s22, 0
      %p96 = por %p94, %p95
      %s98 = sadd.s32 %s97, 1
      %p101 = scmp.eq.s32.totalorder %s16, 1
      %p102 = scmp.ne.s32.totalorder %s97, %s99
      %p103 = scmp.eq.s32.totalorder %s16, 0
      %p104 = por %p102, %p103
      %p105 = scmp.ne.s32.totalorder %s97, %s99
      %p106 = scmp.eq.s32.totalorder %s21, 1
      %p107 = por %p105, %p106
      %p108 = scmp.ne.s32.totalorder %s99, %s100
      %p109 = scmp.eq.s32.totalorder %s21, 0
      %p110 = por %p108, %p109
      %p111 = scmp.ne.s32.totalorder %s99, %s100
      %p112 = scmp.eq.s32.totalorder %s22, 1
      %p113 = por %p111, %p112
      %p115 = scmp.ne.s32.totalorder %s100, %s114
      %p116 = scmp.eq.s32.totalorder %s22, 0
      %p117 = por %p115, %p116
      %s119 = sadd.s32 %s118, 1
      %p122 = scmp.eq.s32.totalorder %s16, 1
      %p123 = scmp.ne.s32.totalorder %s118, %s120
      %p124 = scmp.eq.s32.totalorder %s16, 0
      %p125 = por %p123, %p124
      %p126 = scmp.ne.s32.totalorder %s118, %s120
      %p127 = scmp.eq.s32.totalorder %s21, 1
      %p128 = por %p126, %p127
      %p129 = scmp.ne.s32.totalorder %s120, %s121
      %p130 = scmp.eq.s32.totalorder %s21, 0
      %p131 = por %p129, %p130
      %p132 = scmp.ne.s32.totalorder %s120, %s121
      %p133 = scmp.eq.s32.totalorder %s22, 1
      %p134 = por %p132, %p133
      %p136 = scmp.ne.s32.totalorder %s121, %s135
      %p137 = scmp.eq.s32.totalorder %s22, 0
      %p138 = por %p136, %p137
      %s140 = sadd.s32 %s139, 1
      %p143 = scmp.eq.s32.totalorder %s16, 1
      %p144 = scmp.ne.s32.totalorder %s139, %s141
      %p145 = scmp.eq.s32.totalorder %s16, 0
      %p146 = por %p144, %p145
      %p147 = scmp.ne.s32.totalorder %s139, %s141
      %p148 = scmp.eq.s32.totalorder %s21, 1
      %p149 = por %p147, %p148
      %p150 = scmp.ne.s32.totalorder %s141, %s142
      %p151 = scmp.eq.s32.totalorder %s21, 0
      %p152 = por %p150, %p151
      %p153 = scmp.ne.s32.totalorder %s141, %s142
      %p154 = scmp.eq.s32.totalorder %s22, 1
      %p155 = por %p153, %p154
      %p157 = scmp.ne.s32.totalorder %s142, %s156
      %p158 = scmp.eq.s32.totalorder %s22, 0
      %p159 = por %p157, %p158
      %s161 = sadd.s32 %s160, 1
      %p164 = scmp.eq.s32.totalorder %s16, 1
      %p165 = scmp.ne.s32.totalorder %s160, %s162
      %p166 = scmp.eq.s32.totalorder %s16, 0
      %p167 = por %p165, %p166
      %p168 = scmp.ne.s32.totalorder %s160, %s162
      %p169 = scmp.eq.s32.totalorder %s21, 1
      %p170 = por %p168, %p169
      %p171 = scmp.ne.s32.totalorder %s162, %s163
      %p172 = scmp.eq.s32.totalorder %s21, 0
      %p173 = por %p171, %p172
      %p174 = scmp.ne.s32.totalorder %s162, %s163
      %p175 = scmp.eq.s32.totalorder %s22, 1
      %p176 = por %p174, %p175
      %p178 = scmp.ne.s32.totalorder %s163, %s177
      %p179 = scmp.eq.s32.totalorder %s22, 0
      %p180 = por %p178, %p179
      %s181 = ssub.s32 %s16, %s23
      %p182 = scmp.eq.s32.totalorder %s181, 0
      %s184 = sadd.s32 %s183, 1
      %s185 = scalar_select %p182, %s183, %s184
      %p188 = pneg %p182
      %p189 = scmp.eq.s32.totalorder %s16, 1
      %p190 = por %p188, %p189
      %p191 = scmp.ne.s32.totalorder %s183, %s186
      %p192 = scmp.eq.s32.totalorder %s16, 0
      %p193 = por %p191, %p192
      %p194 = scmp.ne.s32.totalorder %s183, %s186
      %p195 = scmp.eq.s32.totalorder %s21, 1
      %p196 = por %p194, %p195
      %p197 = scmp.ne.s32.totalorder %s186, %s187
      %p198 = scmp.eq.s32.totalorder %s21, 0
      %p199 = por %p197, %p198
      %p200 = scmp.ne.s32.totalorder %s186, %s187
      %p201 = scmp.eq.s32.totalorder %s22, 1
      %p202 = por %p200, %p201
      %p204 = scmp.ne.s32.totalorder %s187, %s203
      %p205 = scmp.eq.s32.totalorder %s22, 0
      %p206 = por %p204, %p205
      %p207 = scmp.le.s32.totalorder 1, %s16
      %p208 = scmp.lt.s32.totalorder %s16, 3
      %p209 = pnand %p207, %p208
      %p210 = pneg %p209
      // Predicated region
      $region9: #{tpu_custom_call.1} parent=5 // pred_check
        _
      $region10: #{tpu_custom_call.1} parent=5 // pred_check_branch
        %212 = sbr.rel (%p209) target = $region12
      $region11: #{tpu_custom_call.1} parent=5 // pred_region
        %s213 = ssub.s32 %s16, 1
        // Predicated region
        $region13: #{tpu_custom_call.1} parent=11 // pred_check
          %p214 = pneg %p89
        $region14: #{tpu_custom_call.1} parent=11 // pred_check_branch
          %216 = sbr.rel (%p214) target = $region16
        $region15: #{tpu_custom_call.1} parent=11 // pred_region
          _
        $region16: #{tpu_custom_call.1} parent=11 // pred_fallthru
          _
        // Predicated region
        $region17: #{tpu_custom_call.1} parent=11 // pred_check
          %p217 = pneg %p110
        $region18: #{tpu_custom_call.1} parent=11 // pred_check_branch
          %219 = sbr.rel (%p217) target = $region20
        $region19: #{tpu_custom_call.1} parent=11 // pred_region
          _
        $region20: #{tpu_custom_call.1} parent=11 // pred_fallthru
          _
        // Predicated region
        $region21: #{tpu_custom_call.1} parent=11 // pred_check
          %p220 = pneg %p131
        $region22: #{tpu_custom_call.1} parent=11 // pred_check_branch
          %222 = sbr.rel (%p220) target = $region24
        $region23: #{tpu_custom_call.1} parent=11 // pred_region
          _
        $region24: #{tpu_custom_call.1} parent=11 // pred_fallthru
          _
        // Predicated region
        $region25: #{tpu_custom_call.1} parent=11 // pred_check
          %p223 = pneg %p152
        $region26: #{tpu_custom_call.1} parent=11 // pred_check_branch
          %225 = sbr.rel (%p223) target = $region28
        $region27: #{tpu_custom_call.1} parent=11 // pred_region
          _
        $region28: #{tpu_custom_call.1} parent=11 // pred_fallthru
          _
        // Predicated region
        $region29: #{tpu_custom_call.1} parent=11 // pred_check
          %p226 = pneg %p173
        $region30: #{tpu_custom_call.1} parent=11 // pred_check_branch
          %228 = sbr.rel (%p226) target = $region32
        $region31: #{tpu_custom_call.1} parent=11 // pred_region
          _
        $region32: #{tpu_custom_call.1} parent=11 // pred_fallthru
          _
      $region12: #{tpu_custom_call.1} parent=5 // pred_fallthru
        _
      %p229 = scmp.lt.s32.totalorder %s16, 2
      // Predicated region
      $region33: #{tpu_custom_call.1} parent=5 // pred_check
        %p230 = pneg %p229
      $region34: #{tpu_custom_call.1} parent=5 // pred_check_branch
        %232 = sbr.rel (%p230) target = $region36
      $region35: #{tpu_custom_call.1} parent=5 // pred_region
        // Predicated region
        $region37: #{tpu_custom_call.1} parent=35 // pred_check
          %p233 = pneg %p36
        $region38: #{tpu_custom_call.1} parent=35 // pred_check_branch
          %235 = sbr.rel (%p233) target = $region40
        $region39: #{tpu_custom_call.1} parent=35 // pred_region
          %p236 = scmp.lt.s32.totalorder %s16, 1
          %s237 = scalar_select %p236, %s16, 1
          %s238 = smul.addr %s237, 8
          %s239 = scalar_lea.vmem %s0, %s238
        $region40: #{tpu_custom_call.1} parent=35 // pred_fallthru
          _
        // Predicated region
        $region41: #{tpu_custom_call.1} parent=35 // pred_check
          %p240 = pneg %p62
        $region42: #{tpu_custom_call.1} parent=35 // pred_check_branch
          %242 = sbr.rel (%p240) target = $region44
        $region43: #{tpu_custom_call.1} parent=35 // pred_region
          %p243 = scmp.lt.s32.totalorder %s16, 1
          %s244 = scalar_select %p243, %s16, 1
          %s245 = smul.addr %s244, 8
          %s246 = scalar_lea.vmem %s1, %s245
        $region44: #{tpu_custom_call.1} parent=35 // pred_fallthru
          _
      $region36: #{tpu_custom_call.1} parent=5 // pred_fallthru
        _
      %p247 = scmp.le.s32.totalorder 1, %s16
      %p248 = scmp.lt.s32.totalorder %s16, 3
      %p249 = pnand %p247, %p248
      %p250 = pneg %p249
      // Predicated region
      $region45: #{tpu_custom_call.1} parent=5 // pred_check
        _
      $region46: #{tpu_custom_call.1} parent=5 // pred_check_branch
        %252 = sbr.rel (%p249) target = $region48
      $region47: #{tpu_custom_call.1} parent=5 // pred_region
        %s253 = ssub.s32 %s16, 1
        %p254 = scmp.lt.s32.totalorder %s21, 1
        %s255 = scalar_select %p254, %s21, 1
        %s256 = smul.addr %s255, 8
        %s257 = scalar_lea.vmem %s0, %s256
        %p258 = pneg %p42
        %p259 = pneg %p39
        %p260 = scmp.lt.s32.totalorder %s21, 1
        %s261 = scalar_select %p260, %s21, 1
        %s262 = smul.addr %s261, 8
        %s263 = scalar_lea.vmem %s1, %s262
        %p264 = pneg %p68
        %p265 = pneg %p65
        %p266 = pneg %p89
        %p267 = pneg %p86
        %p268 = pneg %p110
        %p269 = pneg %p107
        %p270 = pneg %p131
        %p271 = pneg %p128
        %p272 = pneg %p152
        %p273 = pneg %p149
        %p274 = pneg %p173
        %p275 = pneg %p170
        %p276 = pneg %p199
        %p277 = pneg %p196
        %s278 = sand.u32 %s186, 1
        %s279 = scalar_lea.sflag [#allocation3], %s278
        %s280 = sand.u32 %s186, 1
        %s281 = smul.addr %s280, 8
        %s282 = scalar_lea.vmem [#allocation2], %s281
        %p283 = scmp.lt.s32.totalorder %s21, 1
        %s284 = scalar_select %p283, %s21, 1
        %s285 = smul.addr %s284, 8
        %s286 = scalar_lea.vmem %s0, %s285
        %p287 = scmp.lt.s32.totalorder %s21, 1
        %s288 = scalar_select %p287, %s21, 1
        %s289 = smul.addr %s288, 8
        %s290 = scalar_lea.vmem %s1, %s289
        %v291 = vld [vmem:[%s286] sm:$0xff]
        %v292 = vld [vmem:[%s290] sm:$0xff]
        %v293 = vld [vmem:[%s2] sm:$0xff]
        %v294 = vld [vmem:[%s3] sm:$0xff]
        %v295 = vld [vmem:[%s3 + $0x8] sm:$0xff]
        %v296 = vld [vmem:[%s4] sm:$0xff]
        %v297 = vld [vmem:[%s5] sm:$0xff]
        %v298 = vld [vmem:[%s6] sm:$0xff]
        %vm299 = vcmask 64512
        %v301 = vsel %vm299, %v293, 0
        %303 = vmatprep.subr.mxu0 0.0
        %304 = vmatpush1.msra.mxu0 %v292
        %305 = vmatprep.subr.mxu0 0.0
        %306 = vmatpush1.msra.mxu0 0.0
        %307 = vmatprep.subr.mxu0 0.0
        %308 = vmatpush1.msra.mxu0 0.0
        %309 = vmatprep.subr.mxu0 0.0
        %310 = vmatpush1.msra.mxu0 0.0
        %311 = vmatprep.subr.mxu0 0.0
        %312 = vmatpush1.msra.mxu0 0.0
        %313 = vmatprep.subr.mxu0 0.0
        %314 = vmatpush1.msra.mxu0 0.0
        %315 = vmatprep.subr.mxu0 0.0
        %316 = vmatpush1.msra.mxu0 0.0
        %317 = vmatprep.subr.mxu0 0.0
        %318 = vmatpush1.msra.mxu0 0.0
        %319 = vmatprep.subr.mxu0 0.0
        %320 = vmatpush1.msra.mxu0 0.0
        %321 = vmatprep.subr.mxu0 0.0
        %322 = vmatpush1.msra.mxu0 0.0
        %323 = vmatprep.subr.mxu0 0.0
        %324 = vmatpush1.msra.mxu0 0.0
        %325 = vmatprep.subr.mxu0 0.0
        %326 = vmatpush1.msra.mxu0 0.0
        %327 = vmatprep.subr.mxu0 0.0
        %328 = vmatpush1.msra.mxu0 0.0
        %329 = vmatprep.subr.mxu0 0.0
        %330 = vmatpush1.msra.mxu0 0.0
        %331 = vmatprep.subr.mxu0 0.0
        %332 = vmatpush1.msra.mxu0 0.0
        %333 = vmatprep.subr.mxu0 0.0
        %334 = vmatpush1.msra.mxu0 0.0
        %335 = vmatprep.subr.mxu0 0.0
        %336 = vmatpush1.msra.mxu0 0.0
        %337 = vmatprep.subr.mxu0 0.0
        %338 = vmatpush1.msra.mxu0 0.0
        %339 = vmatprep.subr.mxu0 0.0
        %340 = vmatpush1.msra.mxu0 0.0
        %341 = vmatprep.subr.mxu0 0.0
        %342 = vmatpush1.msra.mxu0 0.0
        %343 = vmatprep.subr.mxu0 0.0
        %344 = vmatpush1.msra.mxu0 0.0
        %345 = vmatprep.subr.mxu0 0.0
        %346 = vmatpush1.msra.mxu0 0.0
        %347 = vmatprep.subr.mxu0 0.0
        %348 = vmatpush1.msra.mxu0 0.0
        %349 = vmatprep.subr.mxu0 0.0
        %350 = vmatpush1.msra.mxu0 0.0
        %351 = vmatprep.subr.mxu0 0.0
        %352 = vmatpush1.msra.mxu0 0.0
        %353 = vmatprep.subr.mxu0 0.0
        %354 = vmatpush1.msra.mxu0 0.0
        %355 = vmatprep.subr.mxu0 0.0
        %356 = vmatpush1.msra.mxu0 0.0
        %357 = vmatprep.subr.mxu0 0.0
        %358 = vmatpush1.msra.mxu0 0.0
        %359 = vmatprep.subr.mxu0 0.0
        %360 = vmatpush1.msra.mxu0 0.0
        %361 = vmatprep.subr.mxu0 0.0
        %362 = vmatpush1.msra.mxu0 0.0
        %363 = vmatprep.subr.mxu0 0.0
        %364 = vmatpush1.msra.mxu0 0.0
        %365 = vmatprep.subr.mxu0 0.0
        %366 = vmatpush1.msra.mxu0 0.0
        %367 = vmatprep.mubr.f32.mxu0 0.0
        %368 = vmatmul.mubr.f32.gmra.mrb[0].mxu0 %v301
        %v369 = vpop.f32.mrb[0].mxu0
        %v370 = vadd.f32 0.0, %v369
        %v371 = vpop.f32.mrb[0].mxu0
        %372 = vdwg.mxu0
        %v374 = vsel %vm299, %v294, 0
        %v377 = vsel %vm299, %v295, 0
        %379 = vmatprep.subr.mxu0 0.0
        %380 = vmatpush1.msra.mxu0 %v291
        %381 = vmatprep.subr.mxu0 0.0
        %382 = vmatpush1.msra.mxu0 0.0
        %383 = vmatprep.subr.mxu0 0.0
        %384 = vmatpush1.msra.mxu0 0.0
        %385 = vmatprep.subr.mxu0 0.0
        %386 = vmatpush1.msra.mxu0 0.0
        %387 = vmatprep.subr.mxu0 0.0
        %388 = vmatpush1.msra.mxu0 0.0
        %389 = vmatprep.subr.mxu0 0.0
        %390 = vmatpush1.msra.mxu0 0.0
        %391 = vmatprep.subr.mxu0 0.0
        %392 = vmatpush1.msra.mxu0 0.0
        %393 = vmatprep.subr.mxu0 0.0
        %394 = vmatpush1.msra.mxu0 0.0
        %395 = vmatprep.subr.mxu0 0.0
        %396 = vmatpush1.msra.mxu0 0.0
        %397 = vmatprep.subr.mxu0 0.0
        %398 = vmatpush1.msra.mxu0 0.0
        %399 = vmatprep.subr.mxu0 0.0
        %400 = vmatpush1.msra.mxu0 0.0
        %401 = vmatprep.subr.mxu0 0.0
        %402 = vmatpush1.msra.mxu0 0.0
        %403 = vmatprep.subr.mxu0 0.0
        %404 = vmatpush1.msra.mxu0 0.0
        %405 = vmatprep.subr.mxu0 0.0
        %406 = vmatpush1.msra.mxu0 0.0
        %407 = vmatprep.subr.mxu0 0.0
        %408 = vmatpush1.msra.mxu0 0.0
        %409 = vmatprep.subr.mxu0 0.0
        %410 = vmatpush1.msra.mxu0 0.0
        %411 = vmatprep.subr.mxu0 0.0
        %412 = vmatpush1.msra.mxu0 0.0
        %413 = vmatprep.subr.mxu0 0.0
        %414 = vmatpush1.msra.mxu0 0.0
        %415 = vmatprep.subr.mxu0 0.0
        %416 = vmatpush1.msra.mxu0 0.0
        %417 = vmatprep.subr.mxu0 0.0
        %418 = vmatpush1.msra.mxu0 0.0
        %419 = vmatprep.subr.mxu0 0.0
        %420 = vmatpush1.msra.mxu0 0.0
        %421 = vmatprep.subr.mxu0 0.0
        %422 = vmatpush1.msra.mxu0 0.0
        %423 = vmatprep.subr.mxu0 0.0
        %424 = vmatpush1.msra.mxu0 0.0
        %425 = vmatprep.subr.mxu0 0.0
        %426 = vmatpush1.msra.mxu0 0.0
        %427 = vmatprep.subr.mxu0 0.0
        %428 = vmatpush1.msra.mxu0 0.0
        %429 = vmatprep.subr.mxu0 0.0
        %430 = vmatpush1.msra.mxu0 0.0
        %431 = vmatprep.subr.mxu0 0.0
        %432 = vmatpush1.msra.mxu0 0.0
        %433 = vmatprep.subr.mxu0 0.0
        %434 = vmatpush1.msra.mxu0 0.0
        %435 = vmatprep.subr.mxu0 0.0
        %436 = vmatpush1.msra.mxu0 0.0
        %437 = vmatprep.subr.mxu0 0.0
        %438 = vmatpush1.msra.mxu0 0.0
        %439 = vmatprep.subr.mxu0 0.0
        %440 = vmatpush1.msra.mxu0 0.0
        %441 = vmatprep.subr.mxu0 0.0
        %442 = vmatpush1.msra.mxu0 0.0
        %443 = vmatprep.mubr.f32.mxu0 0.0
        %444 = vmatmul.mubr.f32.gmra.mrb[0].mxu0 %v374
        %v445 = vpop.f32.mrb[0].mxu0
        %v446 = vadd.f32 0.0, %v445
        %v447 = vpop.f32.mrb[0].mxu0
        %448 = vmatprep.mubr.f32.mxu0 0.0
        %449 = vmatmul.mubr.f32.gmra.mrb[0].mxu0 %v377
        %v450 = vpop.f32.mrb[0].mxu0
        %v451 = vadd.f32 0.0, %v450
        %v452 = vpop.f32.mrb[0].mxu0
        %453 = vdwg.mxu0
        %455 = vset.pattern.permute.xlu0 0
        %456 = vperm.xlu0 %455, %v296
        %v457 = vpop.permute.xlu0 %456
        %v459 = vadd.f32 %v451, %v457
        %460 = vxpose.xlu0.b32.start [1/16] %v446, 128
        %461 = vxpose.xlu0.b32.cont [2/16] 0.0, 128
        %462 = vxpose.xlu0.b32.cont [3/16] 0.0, 128
        %463 = vxpose.xlu0.b32.cont [4/16] 0.0, 128
        %464 = vxpose.xlu0.b32.cont [5/16] 0.0, 128
        %465 = vxpose.xlu0.b32.cont [6/16] 0.0, 128
        %466 = vxpose.xlu0.b32.cont [7/16] 0.0, 128
        %467 = vxpose.xlu0.b32.cont [8/16] 0.0, 128
        %468 = vxpose.xlu0.b32.cont [9/16] 0.0, 128
        %469 = vxpose.xlu0.b32.cont [10/16] 0.0, 128
        %470 = vxpose.xlu0.b32.cont [11/16] 0.0, 128
        %471 = vxpose.xlu0.b32.cont [12/16] 0.0, 128
        %472 = vxpose.xlu0.b32.cont [13/16] 0.0, 128
        %473 = vxpose.xlu0.b32.cont [14/16] 0.0, 128
        %474 = vxpose.xlu0.b32.cont [15/16] 0.0, 128
        %475 = vxpose.xlu0.b32.end [16/16] 0.0, 128
        %v476 = vpop.trf.xlu0
        %v477 = vpop.trf.xlu0
        %v478 = vpop.trf.xlu0
        %v479 = vpop.trf.xlu0
        %v480 = vpop.trf.xlu0
        %v481 = vpop.trf.xlu0
        %v482 = vpop.trf.xlu0
        %v483 = vpop.trf.xlu0
        %v484 = vpop.trf.xlu0
        %v485 = vpop.trf.xlu0
        %v486 = vpop.trf.xlu0
        %v487 = vpop.trf.xlu0
        %v488 = vpop.trf.xlu0
        %v489 = vpop.trf.xlu0
        %v490 = vpop.trf.xlu0
        %v491 = vpop.trf.xlu0
        %v493 = vsel %vm299, %v476, 0
        %v496 = vsel %vm299, %v477, 0
        %498 = vmatprep.subr.mxu0 0.0
        %499 = vmatpush1.msra.mxu0 %v370
        %500 = vmatprep.subr.mxu0 0.0
        %501 = vmatpush1.msra.mxu0 0.0
        %502 = vmatprep.subr.mxu0 0.0
        %503 = vmatpush1.msra.mxu0 0.0
        %504 = vmatprep.subr.mxu0 0.0
        %505 = vmatpush1.msra.mxu0 0.0
        %506 = vmatprep.subr.mxu0 0.0
        %507 = vmatpush1.msra.mxu0 0.0
        %508 = vmatprep.subr.mxu0 0.0
        %509 = vmatpush1.msra.mxu0 0.0
        %510 = vmatprep.subr.mxu0 0.0
        %511 = vmatpush1.msra.mxu0 0.0
        %512 = vmatprep.subr.mxu0 0.0
        %513 = vmatpush1.msra.mxu0 0.0
        %514 = vmatprep.subr.mxu0 0.0
        %515 = vmatpush1.msra.mxu0 0.0
        %516 = vmatprep.subr.mxu0 0.0
        %517 = vmatpush1.msra.mxu0 0.0
        %518 = vmatprep.subr.mxu0 0.0
        %519 = vmatpush1.msra.mxu0 0.0
        %520 = vmatprep.subr.mxu0 0.0
        %521 = vmatpush1.msra.mxu0 0.0
        %522 = vmatprep.subr.mxu0 0.0
        %523 = vmatpush1.msra.mxu0 0.0
        %524 = vmatprep.subr.mxu0 0.0
        %525 = vmatpush1.msra.mxu0 0.0
        %526 = vmatprep.subr.mxu0 0.0
        %527 = vmatpush1.msra.mxu0 0.0
        %528 = vmatprep.subr.mxu0 0.0
        %529 = vmatpush1.msra.mxu0 0.0
        %530 = vmatprep.subr.mxu0 0.0
        %531 = vmatpush1.msra.mxu0 0.0
        %532 = vmatprep.subr.mxu0 0.0
        %533 = vmatpush1.msra.mxu0 0.0
        %534 = vmatprep.subr.mxu0 0.0
        %535 = vmatpush1.msra.mxu0 0.0
        %536 = vmatprep.subr.mxu0 0.0
        %537 = vmatpush1.msra.mxu0 0.0
        %538 = vmatprep.subr.mxu0 0.0
        %539 = vmatpush1.msra.mxu0 0.0
        %540 = vmatprep.subr.mxu0 0.0
        %541 = vmatpush1.msra.mxu0 0.0
        %542 = vmatprep.subr.mxu0 0.0
        %543 = vmatpush1.msra.mxu0 0.0
        %544 = vmatprep.subr.mxu0 0.0
        %545 = vmatpush1.msra.mxu0 0.0
        %546 = vmatprep.subr.mxu0 0.0
        %547 = vmatpush1.msra.mxu0 0.0
        %548 = vmatprep.subr.mxu0 0.0
        %549 = vmatpush1.msra.mxu0 0.0
        %550 = vmatprep.subr.mxu0 0.0
        %551 = vmatpush1.msra.mxu0 0.0
        %552 = vmatprep.subr.mxu0 0.0
        %553 = vmatpush1.msra.mxu0 0.0
        %554 = vmatprep.subr.mxu0 0.0
        %555 = vmatpush1.msra.mxu0 0.0
        %556 = vmatprep.subr.mxu0 0.0
        %557 = vmatpush1.msra.mxu0 0.0
        %558 = vmatprep.subr.mxu0 0.0
        %559 = vmatpush1.msra.mxu0 0.0
        %560 = vmatprep.subr.mxu0 0.0
        %561 = vmatpush1.msra.mxu0 0.0
        %562 = vmatprep.mubr.f32.mxu0 0.0
        %563 = vmatmul.mubr.f32.gmra.mrb[0].mxu0 %v493
        %v564 = vpop.f32.mrb[0].mxu0
        %v565 = vadd.f32 0.0, %v564
        %v566 = vpop.f32.mrb[0].mxu0
        %567 = vmatprep.mubr.f32.mxu0 0.0
        %568 = vmatmul.mubr.f32.gmra.mrb[0].mxu0 %v496
        %v569 = vpop.f32.mrb[0].mxu0
        %v570 = vadd.f32 0.0, %v569
        %v571 = vpop.f32.mrb[0].mxu0
        %572 = vdwg.mxu0
        %vm573 = vcmask 130048
        %v574 = vsel %vm573, %v565, -inf
        %v575 = vsel %vm573, %v570, -inf
        %v576 = vmax.f32 %v574, %v575
        %v577 = vrot.slane %v576, 4
        %v578 = vmax.f32 %v576, %v577
        %v579 = vrot.slane %v578, 2
        %v580 = vmax.f32 %v578, %v579
        %v581 = vrot.slane %v580, 1
        %v582 = vmax.f32 %v580, %v581
        %v583 = vsub.f32 %v565, %v582
        %v584 = vsub.f32 %v570, %v582
        %v585 = vmul.f32 %v583, 1.442695
        %v586 = vpow.pop %v585
        %v587 = vmul.f32 %v584, 1.442695
        %v588 = vpow.pop %v587
        %v589 = vsel %vm573, %v586, 0.0
        %v590 = vsel %vm573, %v588, 0.0
        %v591 = vadd.f32 %v589, %v590
        %v592 = vrot.slane %v591, 4
        %v593 = vadd.f32 %v591, %v592
        %v594 = vrot.slane %v593, 2
        %v595 = vadd.f32 %v593, %v594
        %v596 = vrot.slane %v595, 1
        %v597 = vadd.f32 %v595, %v596
        %v598 = vrcp.pop %v597
        %v600 = vsel %vm573, %v598, 0
        %v603 = vsel %vm573, %v586, 0
        %v606 = vsel %vm573, %v588, 0
        %608 = vmatprep.subr.mxu0 0.0
        %609 = vmatpush1.xpose.msra.mxu0 %v603
        %610 = vmatprep.subr.mxu0 0.0
        %611 = vmatpush1.xpose.msra.mxu0 %v606
        %612 = vmatprep.subr.mxu0 0.0
        %613 = vmatpush1.xpose.msra.mxu0 0.0
        %614 = vmatprep.subr.mxu0 0.0
        %615 = vmatpush1.xpose.msra.mxu0 0.0
        %616 = vmatprep.subr.mxu0 0.0
        %617 = vmatpush1.xpose.msra.mxu0 0.0
        %618 = vmatprep.subr.mxu0 0.0
        %619 = vmatpush1.xpose.msra.mxu0 0.0
        %620 = vmatprep.subr.mxu0 0.0
        %621 = vmatpush1.xpose.msra.mxu0 0.0
        %622 = vmatprep.subr.mxu0 0.0
        %623 = vmatpush1.xpose.msra.mxu0 0.0
        %624 = vmatprep.subr.mxu0 0.0
        %625 = vmatpush1.xpose.msra.mxu0 0.0
        %626 = vmatprep.subr.mxu0 0.0
        %627 = vmatpush1.xpose.msra.mxu0 0.0
        %628 = vmatprep.subr.mxu0 0.0
        %629 = vmatpush1.xpose.msra.mxu0 0.0
        %630 = vmatprep.subr.mxu0 0.0
        %631 = vmatpush1.xpose.msra.mxu0 0.0
        %632 = vmatprep.subr.mxu0 0.0
        %633 = vmatpush1.xpose.msra.mxu0 0.0
        %634 = vmatprep.subr.mxu0 0.0
        %635 = vmatpush1.xpose.msra.mxu0 0.0
        %636 = vmatprep.subr.mxu0 0.0
        %637 = vmatpush1.xpose.msra.mxu0 0.0
        %638 = vmatprep.subr.mxu0 0.0
        %639 = vmatpush1.xpose.msra.mxu0 0.0
        %640 = vmatprep.subr.mxu0 0.0
        %641 = vmatpush1.xpose.msra.mxu0 0.0
        %642 = vmatprep.subr.mxu0 0.0
        %643 = vmatpush1.xpose.msra.mxu0 0.0
        %644 = vmatprep.subr.mxu0 0.0
        %645 = vmatpush1.xpose.msra.mxu0 0.0
        %646 = vmatprep.subr.mxu0 0.0
        %647 = vmatpush1.xpose.msra.mxu0 0.0
        %648 = vmatprep.subr.mxu0 0.0
        %649 = vmatpush1.xpose.msra.mxu0 0.0
        %650 = vmatprep.subr.mxu0 0.0
        %651 = vmatpush1.xpose.msra.mxu0 0.0
        %652 = vmatprep.subr.mxu0 0.0
        %653 = vmatpush1.xpose.msra.mxu0 0.0
        %654 = vmatprep.subr.mxu0 0.0
        %655 = vmatpush1.xpose.msra.mxu0 0.0
        %656 = vmatprep.subr.mxu0 0.0
        %657 = vmatpush1.xpose.msra.mxu0 0.0
        %658 = vmatprep.subr.mxu0 0.0
        %659 = vmatpush1.xpose.msra.mxu0 0.0
        %660 = vmatprep.subr.mxu0 0.0
        %661 = vmatpush1.xpose.msra.mxu0 0.0
        %662 = vmatprep.subr.mxu0 0.0
        %663 = vmatpush1.xpose.msra.mxu0 0.0
        %664 = vmatprep.subr.mxu0 0.0
        %665 = vmatpush1.xpose.msra.mxu0 0.0
        %666 = vmatprep.subr.mxu0 0.0
        %667 = vmatpush1.xpose.msra.mxu0 0.0
        %668 = vmatprep.subr.mxu0 0.0
        %669 = vmatpush1.xpose.msra.mxu0 0.0
        %670 = vmatprep.subr.mxu0 0.0
        %671 = vmatpush1.xpose.msra.mxu0 0.0
        %672 = vmatprep.mubr.f32.mxu0 0.0
        %673 = vmatmul.mubr.f32.gmra.mrb[0].mxu0 %v600
        %v674 = vpop.f32.mrb[0].mxu0
        %v675 = vadd.f32 1e-07, %v674
        %v676 = vpop.f32.mrb[0].mxu0
        %677 = vdwg.mxu0
        %v678 = vrcp.pop %v675
        %v679 = vmul.f32 %v459, %v598
        %v681 = vsel %vm573, %v679, 0
        %683 = vmatprep.subr.mxu0 0.0
        %684 = vmatpush1.xpose.msra.mxu0 %v603
        %685 = vmatprep.subr.mxu0 0.0
        %686 = vmatpush1.xpose.msra.mxu0 %v606
        %687 = vmatprep.subr.mxu0 0.0
        %688 = vmatpush1.xpose.msra.mxu0 0.0
        %689 = vmatprep.subr.mxu0 0.0
        %690 = vmatpush1.xpose.msra.mxu0 0.0
        %691 = vmatprep.subr.mxu0 0.0
        %692 = vmatpush1.xpose.msra.mxu0 0.0
        %693 = vmatprep.subr.mxu0 0.0
        %694 = vmatpush1.xpose.msra.mxu0 0.0
        %695 = vmatprep.subr.mxu0 0.0
        %696 = vmatpush1.xpose.msra.mxu0 0.0
        %697 = vmatprep.subr.mxu0 0.0
        %698 = vmatpush1.xpose.msra.mxu0 0.0
        %699 = vmatprep.subr.mxu0 0.0
        %700 = vmatpush1.xpose.msra.mxu0 0.0
        %701 = vmatprep.subr.mxu0 0.0
        %702 = vmatpush1.xpose.msra.mxu0 0.0
        %703 = vmatprep.subr.mxu0 0.0
        %704 = vmatpush1.xpose.msra.mxu0 0.0
        %705 = vmatprep.subr.mxu0 0.0
        %706 = vmatpush1.xpose.msra.mxu0 0.0
        %707 = vmatprep.subr.mxu0 0.0
        %708 = vmatpush1.xpose.msra.mxu0 0.0
        %709 = vmatprep.subr.mxu0 0.0
        %710 = vmatpush1.xpose.msra.mxu0 0.0
        %711 = vmatprep.subr.mxu0 0.0
        %712 = vmatpush1.xpose.msra.mxu0 0.0
        %713 = vmatprep.subr.mxu0 0.0
        %714 = vmatpush1.xpose.msra.mxu0 0.0
        %715 = vmatprep.subr.mxu0 0.0
        %716 = vmatpush1.xpose.msra.mxu0 0.0
        %717 = vmatprep.subr.mxu0 0.0
        %718 = vmatpush1.xpose.msra.mxu0 0.0
        %719 = vmatprep.subr.mxu0 0.0
        %720 = vmatpush1.xpose.msra.mxu0 0.0
        %721 = vmatprep.subr.mxu0 0.0
        %722 = vmatpush1.xpose.msra.mxu0 0.0
        %723 = vmatprep.subr.mxu0 0.0
        %724 = vmatpush1.xpose.msra.mxu0 0.0
        %725 = vmatprep.subr.mxu0 0.0
        %726 = vmatpush1.xpose.msra.mxu0 0.0
        %727 = vmatprep.subr.mxu0 0.0
        %728 = vmatpush1.xpose.msra.mxu0 0.0
        %729 = vmatprep.subr.mxu0 0.0
        %730 = vmatpush1.xpose.msra.mxu0 0.0
        %731 = vmatprep.subr.mxu0 0.0
        %732 = vmatpush1.xpose.msra.mxu0 0.0
        %733 = vmatprep.subr.mxu0 0.0
        %734 = vmatpush1.xpose.msra.mxu0 0.0
        %735 = vmatprep.subr.mxu0 0.0
        %736 = vmatpush1.xpose.msra.mxu0 0.0
        %737 = vmatprep.subr.mxu0 0.0
        %738 = vmatpush1.xpose.msra.mxu0 0.0
        %739 = vmatprep.subr.mxu0 0.0
        %740 = vmatpush1.xpose.msra.mxu0 0.0
        %741 = vmatprep.subr.mxu0 0.0
        %742 = vmatpush1.xpose.msra.mxu0 0.0
        %743 = vmatprep.subr.mxu0 0.0
        %744 = vmatpush1.xpose.msra.mxu0 0.0
        %745 = vmatprep.subr.mxu0 0.0
        %746 = vmatpush1.xpose.msra.mxu0 0.0
        %747 = vmatprep.mubr.f32.mxu0 0.0
        %748 = vmatmul.mubr.f32.gmra.mrb[0].mxu0 %v681
        %v749 = vpop.f32.mrb[0].mxu0
        %v750 = vadd.f32 0.0, %v749
        %v751 = vpop.f32.mrb[0].mxu0
        %752 = vdwg.mxu0
        %v753 = vlaneseq
        %v754 = vshrl.u32 %v753, 7
        %v755 = vsub.s32 0, %v754
        %v756 = vrot.slane %v678, %v755
        %v757 = vmul.f32 %v750, %v756
        %v758 = vsub.f32 %v291, %v757
        %760 = vset.pattern.permute.xlu0 0
        %761 = vperm.xlu0 %760, %v298
        %v762 = vpop.permute.xlu0 %761
        %v765 = vsel %vm299, %v297, 0
        %767 = vmatprep.subr.mxu0 0.0
        %768 = vmatpush1.msra.mxu0 %v758
        %769 = vmatprep.subr.mxu0 0.0
        %770 = vmatpush1.msra.mxu0 0.0
        %771 = vmatprep.subr.mxu0 0.0
        %772 = vmatpush1.msra.mxu0 0.0
        %773 = vmatprep.subr.mxu0 0.0
        %774 = vmatpush1.msra.mxu0 0.0
        %775 = vmatprep.subr.mxu0 0.0
        %776 = vmatpush1.msra.mxu0 0.0
        %777 = vmatprep.subr.mxu0 0.0
        %778 = vmatpush1.msra.mxu0 0.0
        %779 = vmatprep.subr.mxu0 0.0
        %780 = vmatpush1.msra.mxu0 0.0
        %781 = vmatprep.subr.mxu0 0.0
        %782 = vmatpush1.msra.mxu0 0.0
        %783 = vmatprep.subr.mxu0 0.0
        %784 = vmatpush1.msra.mxu0 0.0
        %785 = vmatprep.subr.mxu0 0.0
        %786 = vmatpush1.msra.mxu0 0.0
        %787 = vmatprep.subr.mxu0 0.0
        %788 = vmatpush1.msra.mxu0 0.0
        %789 = vmatprep.subr.mxu0 0.0
        %790 = vmatpush1.msra.mxu0 0.0
        %791 = vmatprep.subr.mxu0 0.0
        %792 = vmatpush1.msra.mxu0 0.0
        %793 = vmatprep.subr.mxu0 0.0
        %794 = vmatpush1.msra.mxu0 0.0
        %795 = vmatprep.subr.mxu0 0.0
        %796 = vmatpush1.msra.mxu0 0.0
        %797 = vmatprep.subr.mxu0 0.0
        %798 = vmatpush1.msra.mxu0 0.0
        %799 = vmatprep.subr.mxu0 0.0
        %800 = vmatpush1.msra.mxu0 0.0
        %801 = vmatprep.subr.mxu0 0.0
        %802 = vmatpush1.msra.mxu0 0.0
        %803 = vmatprep.subr.mxu0 0.0
        %804 = vmatpush1.msra.mxu0 0.0
        %805 = vmatprep.subr.mxu0 0.0
        %806 = vmatpush1.msra.mxu0 0.0
        %807 = vmatprep.subr.mxu0 0.0
        %808 = vmatpush1.msra.mxu0 0.0
        %809 = vmatprep.subr.mxu0 0.0
        %810 = vmatpush1.msra.mxu0 0.0
        %811 = vmatprep.subr.mxu0 0.0
        %812 = vmatpush1.msra.mxu0 0.0
        %813 = vmatprep.subr.mxu0 0.0
        %814 = vmatpush1.msra.mxu0 0.0
        %815 = vmatprep.subr.mxu0 0.0
        %816 = vmatpush1.msra.mxu0 0.0
        %817 = vmatprep.subr.mxu0 0.0
        %818 = vmatpush1.msra.mxu0 0.0
        %819 = vmatprep.subr.mxu0 0.0
        %820 = vmatpush1.msra.mxu0 0.0
        %821 = vmatprep.subr.mxu0 0.0
        %822 = vmatpush1.msra.mxu0 0.0
        %823 = vmatprep.subr.mxu0 0.0
        %824 = vmatpush1.msra.mxu0 0.0
        %825 = vmatprep.subr.mxu0 0.0
        %826 = vmatpush1.msra.mxu0 0.0
        %827 = vmatprep.subr.mxu0 0.0
        %828 = vmatpush1.msra.mxu0 0.0
        %829 = vmatprep.subr.mxu0 0.0
        %830 = vmatpush1.msra.mxu0 0.0
        %831 = vmatprep.mubr.f32.mxu0 0.0
        %832 = vmatmul.mubr.f32.gmra.mrb[0].mxu0 %v765
        %v833 = vpop.f32.mrb[0].mxu0
        %v834 = vadd.f32 %v762, %v833
        %v835 = vpop.f32.mrb[0].mxu0
        %836 = vdwg.mxu0
        %v837 = vmax.f32 %v834, 0.0
        %v838 = vadd.f32 %v291, %v837
        %839 = vst.msk [vmem:[%s282] sm:$0xff] %vm573, %v838
        %s840 = sand.u32 %s186, 1
        %s841 = scalar_lea.sflag [#allocation3], %s840
        %s842 = sand.u32 %s186, 1
        %s843 = smul.addr %s842, 8
        %s844 = scalar_lea.vmem [#allocation2], %s843
        // Predicated region
        $region49: #{tpu_custom_call.1} parent=47 // pred_check
          %p845 = pneg %p196
        $region50: #{tpu_custom_call.1} parent=47 // pred_check_branch
          %847 = sbr.rel (%p845) target = $region52
        $region51: #{tpu_custom_call.1} parent=47 // pred_region
          %s849 = ssub.s32 128, 128
          %850 = vsyncadd %s841, %s849
          %s851 = smul.addr %s21, 128
          %s852 = scalar_lea.hbm %s7, %s851
          %s854 = sshll.u32 %s844, 4
          %s855 = int_to_ptr.vmem [resolvable:$true] %s854
          %857 = dma.vmem_to_hbm [thread:$0]  %s855, 128, %s852, %s841
        $region52: #{tpu_custom_call.1} parent=47 // pred_fallthru
          _
      $region48: #{tpu_custom_call.1} parent=5 // pred_fallthru
        _
      %p858 = scmp.le.s32.totalorder 2, %s16
      // Predicated region
      $region53: #{tpu_custom_call.1} parent=5 // pred_check
        %p859 = pneg %p858
      $region54: #{tpu_custom_call.1} parent=5 // pred_check_branch
        %861 = sbr.rel (%p859) target = $region56
      $region55: #{tpu_custom_call.1} parent=5 // pred_region
        %s862 = ssub.s32 %s16, 2
        // Predicated region
        $region57: #{tpu_custom_call.1} parent=55 // pred_check
          %p863 = pneg %p202
        $region58: #{tpu_custom_call.1} parent=55 // pred_check_branch
          %865 = sbr.rel (%p863) target = $region60
        $region59: #{tpu_custom_call.1} parent=55 // pred_region
          %s866 = sand.u32 %s187, 1
          %s867 = scalar_lea.sflag [#allocation3], %s866
          %s868 = sand.u32 %s187, 1
          %s869 = smul.addr %s868, 8
          %s870 = scalar_lea.vmem [#allocation2], %s869
          %871 = dma.done %s867, 128
        $region60: #{tpu_custom_call.1} parent=55 // pred_fallthru
          _
      $region56: #{tpu_custom_call.1} parent=5 // pred_fallthru
        _
    $region6: #{tpu_custom_call.1} parent=1 // loop_footer
      %s20 = sadd.s32 1, %s16
    $region7: #{tpu_custom_call.1} parent=1 // loop_footer_branch
      %15 = sbr.rel target = $region3
    $region8: #{tpu_custom_call.1} parent=1 // loop_exit
      _
    %872 = vsyncpa [#allocation3], 1
    %s873 = scalar_lea.sflag [#allocation3], 1
    %874 = vsyncpa %s873, 1

</llo_original>
